<compile_context>
chip_gen: v7x
topology: tpu7x:2x2x1
jax: 0.10.0
libtpu: 0.0.40
codegen_flags: <defaults>
</compile_context>

<pallas_src>
import functools
import math

import jax
import jax.numpy as jnp
import numpy as np
from jax import lax
from jax.experimental import pallas as pl
from jax.experimental.pallas import tpu as pltpu


# ----------------------------- Pallas kernel --------------------------------
def _bert_embedding_kernel(seq_ids_ref,   # SMEM (B*S,) int32      [scalar prefetch]
                           seg_ref,       # VMEM (TS, 1) int32
                           tok_hbm_ref,   # ANY/HBM (V, E)          [raw ref, manual DMA]
                           seg_tab_ref,   # VMEM (3, E)             [resident]
                           pe_ref,        # VMEM (S, E)             [resident]
                           out_ref,       # VMEM (TS, E)
                           gbuf_ref,      # VMEM scratch (TS, E)    [gather landing buffer]
                           dma_sem,       # shared DMA semaphore
                           *, seq_len):
    TS = out_ref.shape[0]
    base = pl.program_id(0) * TS          # first flattened row of this tile

    # One (1, E) row copy HBM -> VMEM per token in the tile. All copies share one
    # DMA semaphore; waiting TS times (one row's byte-count each) guarantees all
    # rows have landed before the vector read of gbuf_ref.
    # NOTE: out-of-range token ids would be an OOB DMA (runtime-checked), matching
    # PyTorch's "invalid index" failure mode rather than silently producing zeros.
    def row_copy(r):
        tid = seq_ids_ref[base + r]
        return pltpu.make_async_copy(
            tok_hbm_ref.at[pl.ds(tid, 1)],
            gbuf_ref.at[pl.ds(r, 1)],
            dma_sem)

    def _start(r, carry):
        row_copy(r).start()
        return carry
    lax.fori_loop(0, TS, _start, 0)

    # --- positional slice + segment select while the gather DMAs are in flight --
    pos_start = base % seq_len                      # TS divides seq_len -> no wrap
    pos_start = pl.multiple_of(pos_start, TS)
    pe_tile = pe_ref[pl.ds(pos_start, TS), :].astype(jnp.float32)      # (TS, E)

    seg = seg_ref[...]                              # (TS, 1) int32
    st = seg_tab_ref[...].astype(jnp.float32)       # (3, E)
    seg_emb = jnp.where(seg == 0, st[0:1, :],
                        jnp.where(seg == 1, st[1:2, :], st[2:3, :]))   # (TS, E)

    def _wait(r, carry):
        row_copy(r).wait()
        return carry
    lax.fori_loop(0, TS, _wait, 0)

    tok_emb = gbuf_ref[...].astype(jnp.float32)     # (TS, E)

    # TODO(synk): nn.Dropout(p=0.1) is implemented as identity (eval mode).
    out_ref[...] = (tok_emb + pe_tile + seg_emb).astype(out_ref.dtype)


# ----------------------------- Wrapper ---------------------------------------
def _choose_row_tile(S, max_rows=512):
    """Largest divisor of S that is a multiple of 8 and <= max_rows."""
    best = None
    for ts in range(8, min(S, max_rows) + 1, 8):
        if S % ts == 0:
            best = ts
    return best


def bert_embedding(sequence, segment_label, tok_table, seg_table, pe):
    B, S = sequence.shape
    V, E = tok_table.shape
    assert S % 8 == 0, "seq_len must be a multiple of 8 for the flattened row tiling"
    TS = _choose_row_tile(S)
    n_tiles = (B * S) // TS

    # Token ids go to SMEM (scalar prefetch) to drive the DMA gather; segment ids
    # stay as a (TS, 1) VMEM block (they feed a vectorized 3-way select).
    seq_ids = sequence.reshape(B * S).astype(jnp.int32)
    seg_flat = segment_label.reshape(B * S, 1).astype(jnp.int32)
    pe2d = pe[0, :S, :].astype(jnp.float32)                 # (S, E) resident slab

    kernel = functools.partial(_bert_embedding_kernel, seq_len=S)

    grid_spec = pltpu.PrefetchScalarGridSpec(
        num_scalar_prefetch=1,
        grid=(n_tiles,),
        in_specs=[
            pl.BlockSpec((TS, 1), lambda i, ids: (i, 0)),    # segment ids (per tile)
            pl.BlockSpec(memory_space=pl.ANY),               # token table stays in HBM
            pl.BlockSpec((3, E), lambda i, ids: (0, 0)),     # resident segment table
            pl.BlockSpec((S, E), lambda i, ids: (0, 0)),     # resident positional table
        ],
        out_specs=pl.BlockSpec((TS, E), lambda i, ids: (i, 0)),
        scratch_shapes=[
            pltpu.VMEM((TS, E), tok_table.dtype),            # gather landing buffer
            pltpu.SemaphoreType.DMA,                         # shared gather semaphore
        ],
    )

    out_flat = pl.pallas_call(
        kernel,
        out_shape=jax.ShapeDtypeStruct((B * S, E), jnp.float32),
        grid_spec=grid_spec,
        compiler_params=pltpu.CompilerParams(
            dimension_semantics=("parallel",)),
    )(seq_ids, seg_flat, tok_table, seg_table, pe2d)

    return out_flat.reshape(B, S, E)


# ----------------------------- Parameter setup ------------------------------
def make_positional_embedding(d_model, max_len):
    # Exact replica of the (quirky) reference PositionalEmbedding init.
    pe = np.zeros((max_len, d_model), dtype=np.float32)
    for pos in range(max_len):
        for i in range(0, d_model, 2):
            pe[pos, i] = math.sin(pos / 10000 ** (2 * i / d_model))
            pe[pos, i + 1] = math.cos(pos / 10000 ** (2 * (i + 1) / d_model))
    return jnp.asarray(pe)[None, :, :]  # (1, max_len, d_model)


def make_embedding_table(key, num_embeddings, embed_size, padding_idx=0):
    # nn.Embedding default init: N(0, 1); padding_idx row zeroed.
    w = jax.random.normal(key, (num_embeddings, embed_size), dtype=jnp.float32)
    w = w.at[padding_idx].set(0.0)
    return w


# ----------------------------- Reference (plain JAX) ------------------------
def bert_embedding_ref(sequence, segment_label, tok_table, seg_table, pe):
    return tok_table[sequence] + pe + seg_table[segment_label]


if __name__ == "__main__":
    vocab_size = 32
    embed_size = 128     # multiple of 128 -> lane-dense output tiles
    seq_len = 64         # module default seq_len
    batch = 2

    key = jax.random.PRNGKey(0)
    k_tok, k_seg, k_ids, k_lab = jax.random.split(key, 4)

    tok_table = make_embedding_table(k_tok, vocab_size, embed_size, padding_idx=0)
    seg_table = make_embedding_table(k_seg, 3, embed_size, padding_idx=0)
    pe = make_positional_embedding(embed_size, seq_len)   # (1, seq_len, embed_size)

    sequence = jax.random.randint(k_ids, (batch, seq_len), 0, vocab_size, dtype=jnp.int32)
    segment_label = jax.random.randint(k_lab, (batch, seq_len), 0, 3, dtype=jnp.int32)

    out = bert_embedding(sequence, segment_label, tok_table, seg_table, pe)
    out = jax.block_until_ready(out)

    ref = bert_embedding_ref(sequence, segment_label, tok_table, seg_table, pe)
    np.testing.assert_allclose(np.asarray(out), np.asarray(ref), rtol=1e-5, atol=1e-5)

    print("KERNEL_OK")
</pallas_src>

<mosaic_0001>
module attributes {stable_mosaic.version = 11 : i64} {
  func.func @_bert_embedding_kernel(%arg0: i32, %arg1: memref<128xi32, #tpu.memory_space<smem>>, %arg2: memref<64x1xi32, #tpu.memory_space<vmem>>, %arg3: memref<32x128xf32, #tpu.memory_space<any>>, %arg4: memref<3x128xf32, #tpu.memory_space<vmem>>, %arg5: memref<64x128xf32, #tpu.memory_space<vmem>>, %arg6: memref<64x128xf32, #tpu.memory_space<vmem>>, %arg7: memref<64x128xf32, #tpu.memory_space<vmem>>, %arg8: memref<!tpu.dma_semaphore, #tpu.memory_space<semaphore_mem>>) attributes {dimension_semantics = [#tpu.dimension_semantics<parallel>], iteration_bounds = array<i64: 2>, scalar_prefetch = 1 : i64, scratch_operands = 2 : i64, tpu.core_type = #tpu.core_type<tc>, window_params = [{transform_indices = @transform_0, window_bounds = array<i64: 64, 1>}, {}, {pipeline_mode = #tpu.pipeline_mode<synchronous>, transform_indices = @transform_2, window_bounds = array<i64: 3, 128>}, {pipeline_mode = #tpu.pipeline_mode<synchronous>, transform_indices = @transform_3, window_bounds = array<i64: 64, 128>}, {transform_indices = @transform_4, window_bounds = array<i64: 64, 128>}]} {
    %c64_i32 = arith.constant 64 : i32
    %0 = arith.muli %arg0, %c64_i32 : i32
    %c0_i32 = arith.constant 0 : i32
    %c64_i32_0 = arith.constant 64 : i32
    %1 = arith.addi %c0_i32, %c64_i32_0 : i32
    %c1_i32 = arith.constant 1 : i32
    scf.for %arg9 = %c0_i32 to %1 step %c1_i32  : i32 {
      %41 = arith.addi %0, %arg9 : i32
      %42 = arith.index_cast %41 : i32 to index
      %43 = memref.load %arg1[%42] : memref<128xi32, #tpu.memory_space<smem>>
      %c0_i32_22 = arith.constant 0 : i32
      %44 = tpu.memref_slice %arg3[%43, %c0_i32_22] : memref<32x128xf32, #tpu.memory_space<any>> -> memref<1x128xf32, #tpu.memory_space<any>>
      %c0_i32_23 = arith.constant 0 : i32
      %45 = tpu.memref_slice %arg7[%arg9, %c0_i32_23] : memref<64x128xf32, #tpu.memory_space<vmem>> -> memref<1x128xf32, #tpu.memory_space<vmem>>
      tpu.enqueue_dma source(%44 : memref<1x128xf32, #tpu.memory_space<any>>) target(%45 : memref<1x128xf32, #tpu.memory_space<vmem>>) target_semaphore(%arg8 : memref<!tpu.dma_semaphore, #tpu.memory_space<semaphore_mem>>)
    }
    %c64_i32_1 = arith.constant 64 : i32
    %c64_i32_2 = arith.constant 64 : i32
    %c0_i32_3 = arith.constant 0 : i32
    %2 = arith.cmpi eq, %c64_i32_2, %c0_i32_3 : i32
    %c1_i32_4 = arith.constant 1 : i32
    %3 = arith.select %2, %c1_i32_4, %c64_i32_2 : i32
    %4 = arith.remsi %0, %3 : i32
    %c0_i32_5 = arith.constant 0 : i32
    %5 = arith.cmpi ne, %4, %c0_i32_5 : i32
    %c0_i32_6 = arith.constant 0 : i32
    %6 = arith.cmpi slt, %4, %c0_i32_6 : i32
    %c0_i32_7 = arith.constant 0 : i32
    %7 = arith.cmpi slt, %3, %c0_i32_7 : i32
    %8 = arith.xori %6, %7 : i1
    %9 = arith.andi %8, %5 : i1
    %10 = arith.addi %4, %3 : i32
    %11 = arith.select %9, %10, %4 : i32
    %12 = tpu.assume_multiple %11, 64 : i32
    %13 = arith.index_cast %12 : i32 to index
    %c0 = arith.constant 0 : index
    %14 = vector.load %arg5[%13, %c0] : memref<64x128xf32, #tpu.memory_space<vmem>>, vector<64x128xf32>
    %c0_8 = arith.constant 0 : index
    %c0_9 = arith.constant 0 : index
    %15 = vector.load %arg2[%c0_8, %c0_9] : memref<64x1xi32, #tpu.memory_space<vmem>>, vector<64x1xi32>
    %c0_10 = arith.constant 0 : index
    %c0_11 = arith.constant 0 : index
    %16 = vector.load %arg4[%c0_10, %c0_11] : memref<3x128xf32, #tpu.memory_space<vmem>>, vector<3x128xf32>
    %c0_i32_12 = arith.constant 0 : i32
    %17 = vector.broadcast %c0_i32_12 : i32 to vector<64x1xi32>
    %18 = arith.cmpi eq, %15, %17 : vector<64x1xi32>
    %19 = vector.extract_strided_slice %16 {offsets = [0, 0], sizes = [1, 128], strides = [1, 1]} : vector<3x128xf32> to vector<1x128xf32>
    %c1_i32_13 = arith.constant 1 : i32
    %20 = vector.broadcast %c1_i32_13 : i32 to vector<64x1xi32>
    %21 = arith.cmpi eq, %15, %20 : vector<64x1xi32>
    %22 = vector.extract_strided_slice %16 {offsets = [1, 0], sizes = [1, 128], strides = [1, 1]} : vector<3x128xf32> to vector<1x128xf32>
    %23 = vector.extract_strided_slice %16 {offsets = [2, 0], sizes = [1, 128], strides = [1, 1]} : vector<3x128xf32> to vector<1x128xf32>
    %24 = vector.shape_cast %21 : vector<64x1xi1> to vector<64x1xi1>
    %25 = vector.broadcast %24 : vector<64x1xi1> to vector<64x128xi1>
    %26 = vector.shape_cast %22 : vector<1x128xf32> to vector<1x128xf32>
    %27 = vector.broadcast %26 : vector<1x128xf32> to vector<64x128xf32>
    %28 = vector.shape_cast %23 : vector<1x128xf32> to vector<1x128xf32>
    %29 = vector.broadcast %28 : vector<1x128xf32> to vector<64x128xf32>
    %30 = arith.select %25, %27, %29 : vector<64x128xi1>, vector<64x128xf32>
    %31 = vector.shape_cast %18 : vector<64x1xi1> to vector<64x1xi1>
    %32 = vector.broadcast %31 : vector<64x1xi1> to vector<64x128xi1>
    %33 = vector.shape_cast %19 : vector<1x128xf32> to vector<1x128xf32>
    %34 = vector.broadcast %33 : vector<1x128xf32> to vector<64x128xf32>
    %35 = arith.select %32, %34, %30 : vector<64x128xi1>, vector<64x128xf32>
    %c0_i32_14 = arith.constant 0 : i32
    %c64_i32_15 = arith.constant 64 : i32
    %36 = arith.addi %c0_i32_14, %c64_i32_15 : i32
    %c1_i32_16 = arith.constant 1 : i32
    scf.for %arg9 = %c0_i32_14 to %36 step %c1_i32_16  : i32 {
      %41 = arith.addi %0, %arg9 : i32
      %42 = arith.index_cast %41 : i32 to index
      %43 = memref.load %arg1[%42] : memref<128xi32, #tpu.memory_space<smem>>
      %c0_i32_22 = arith.constant 0 : i32
      %44 = tpu.memref_slice %arg3[%43, %c0_i32_22] : memref<32x128xf32, #tpu.memory_space<any>> -> memref<1x128xf32, #tpu.memory_space<any>>
      %c0_i32_23 = arith.constant 0 : i32
      %45 = tpu.memref_slice %arg7[%arg9, %c0_i32_23] : memref<64x128xf32, #tpu.memory_space<vmem>> -> memref<1x128xf32, #tpu.memory_space<vmem>>
      tpu.wait_dma2 semaphore(%arg8 : memref<!tpu.dma_semaphore, #tpu.memory_space<semaphore_mem>>) src(%44 : memref<1x128xf32, #tpu.memory_space<any>>) dst(%45 : memref<1x128xf32, #tpu.memory_space<vmem>>)
    }
    %c64_i32_17 = arith.constant 64 : i32
    %c0_18 = arith.constant 0 : index
    %c0_19 = arith.constant 0 : index
    %37 = vector.load %arg7[%c0_18, %c0_19] : memref<64x128xf32, #tpu.memory_space<vmem>>, vector<64x128xf32>
    %38 = arith.addf %37, %14 : vector<64x128xf32>
    %39 = arith.addf %38, %35 : vector<64x128xf32>
    %c0_20 = arith.constant 0 : index
    %c0_21 = arith.constant 0 : index
    %40 = vector.load %arg6[%c0_20, %c0_21] : memref<64x128xf32, #tpu.memory_space<vmem>>, vector<64x128xf32>
    tpu.vector_store %arg6[%c0_20, %c0_21], %39 {strides = array<i32>} : memref<64x128xf32, #tpu.memory_space<vmem>>, vector<64x128xf32>,
    return
  }
  func.func @transform_0(%arg0: i32, %arg1: memref<128xi32, #tpu.memory_space<smem>>) -> (i32, i32) {
    %c0_i32 = arith.constant 0 : i32
    %c0_i32_0 = arith.constant 0 : i32
    return %arg0, %c0_i32 : i32, i32
  }
  func.func @transform_2(%arg0: i32, %arg1: memref<128xi32, #tpu.memory_space<smem>>) -> (i32, i32) {
    %c0_i32 = arith.constant 0 : i32
    %c0_i32_0 = arith.constant 0 : i32
    %c0_i32_1 = arith.constant 0 : i32
    return %c0_i32, %c0_i32_0 : i32, i32
  }
  func.func @transform_3(%arg0: i32, %arg1: memref<128xi32, #tpu.memory_space<smem>>) -> (i32, i32) {
    %c0_i32 = arith.constant 0 : i32
    %c0_i32_0 = arith.constant 0 : i32
    %c0_i32_1 = arith.constant 0 : i32
    return %c0_i32, %c0_i32_0 : i32, i32
  }
  func.func @transform_4(%arg0: i32, %arg1: memref<128xi32, #tpu.memory_space<smem>>) -> (i32, i32) {
    %c0_i32 = arith.constant 0 : i32
    %c0_i32_0 = arith.constant 0 : i32
    return %arg0, %c0_i32 : i32, i32
  }
}

</mosaic_0001>

<llo_original>
// kernel: tpu_custom_call.1
$region0: #{tpu_custom_call.1}
  #allocation0 [shape = 'u32[]', space=smem, size = 0x4, offset = 0x4, fixed_abs, tag = 'smem constant byte address 0x4 - core index']
  #allocation1 [shape = 'u32[144,128]{1,0:T(1,128)}', space=vmem, size = 0x12000, scoped, tag = 'internal scratch']
  #allocation2 [shape = 'f32[64,128]{1,0:T(8,128)}', space=vmem, size = 0x8000, scoped, tag = 'scratch operand']
  #allocation3 [shape = 's32[1]{0}', space=sflag, size = 0x4, scoped, tag = 'scratch operand']
  #allocation4 [shape = 's32[1]{0}', space=sflag, size = 0x4, scoped, tag = 'scoped memory for tpu_custom_call.1']
  #allocation5 [shape = 'u8[512]{0}', space=smem, size = 0x200, scoped, tag = 'prefetched SMEM operand 0']
  #allocation8 [shape = 's32[]', space=sflag, size = 0x4, offset = 0, fixed_abs, tag = 'sflag constant byte address 0x0 - dummy sync flag']
  %s0 = inlined_call_operand.vmem [shape: s32[128], index: 0, kind: input, shape index: {}]
  %s1 = inlined_call_operand.vmem [shape: s32[128,1], index: 1, kind: input, shape index: {}]
  %s2 = inlined_call_operand.vmem [shape: f32[32,128], index: 2, kind: input, shape index: {}]
  %s3 = inlined_call_operand.vmem [shape: f32[3,128], index: 3, kind: input, shape index: {}]
  %s4 = inlined_call_operand.vmem [shape: f32[64,128], index: 4, kind: input, shape index: {}]
  %s5 = inlined_call_operand.hbm [shape: f32[128,128], index: 5, kind: output, shape index: {}]
  %s6 = sld [smem:[#allocation0]]
  $region89: #{tpu_custom_call.1} parent=0
    _
  %s8 = ssub.s32 1, %s6
  %s9 = scalar_select 0, %s8, %s6
  %s10 = sshll.u32 %s0, 4
  %s11 = int_to_ptr.vmem [resolvable:$true] %s10
  %13 = dma.vmem_to_smem %s11, 16, [#allocation5], [#allocation4]
  %14 = dma.done [#allocation4], 16
  %15 = sfence
  $region1: #{tpu_custom_call.1} parent=0
    #allocation6 [shape = 'u8[65536]{0}', space=vmem, size = 0x10000, scoped, tag = 'output window, operand 0']
    #allocation7 [shape = 's32[2]{0}', space=sflag, size = 0x8, scoped, tag = 'scoped memory for tpu_custom_call.1']
    %16 = vsyncpa [#allocation7], 0
    %s17 = scalar_lea.sflag [#allocation7], 1
    %18 = vsyncpa %s17, 0
    loop: start=0, step=1, limit=4
    $region2: #{tpu_custom_call.1} parent=1 // loop_pre_header
      _
    $region3: #{tpu_custom_call.1} parent=1 // loop_header
      %s20 = sphi 0, %s24
      %p21 = scmp.ge.s32.totalorder %s20, 4
      %s30 = sphi 0, %s32
      %s33 = sphi 0, %s30
      %s34 = sphi 0, %s33
      %s50 = sphi 0, %s34
      %s54 = sphi 0, %s54
      %s56 = sphi 0, %s54
      %s57 = sphi 0, %s56
      %s71 = sphi 0, %s57
      %s75 = sphi 0, %s75
      %s77 = sphi 0, %s75
      %s78 = sphi 0, %s77
      %s92 = sphi 0, %s78
      %s98 = sphi 0, %s100
      %s101 = sphi 0, %s98
      %s102 = sphi 0, %s101
      %s118 = sphi 0, %s102
    $region4: #{tpu_custom_call.1} parent=1 // loop_header_branch
      %23 = sbr.rel (%p21) target = $region8
    $region5: #{tpu_custom_call.1} parent=1 // loop_body
      %s25 = ssub.s32 %s20, 1
      %s26 = ssub.s32 %s20, 2
      %s27 = sadd.s32 %s20, 1
      %s28 = ssub.s32 %s20, %s27
      %p29 = scmp.eq.s32.totalorder %s28, 0
      %s31 = sadd.s32 %s30, 1
      %s32 = scalar_select %p29, %s30, %s31
      %p35 = pneg %p29
      %p36 = scmp.eq.s32.totalorder %s20, 1
      %p37 = por %p35, %p36
      %p38 = scmp.ne.s32.totalorder %s30, %s33
      %p39 = scmp.eq.s32.totalorder %s20, 0
      %p40 = por %p38, %p39
      %p41 = scmp.ne.s32.totalorder %s30, %s33
      %p42 = scmp.eq.s32.totalorder %s25, 1
      %p43 = por %p41, %p42
      %p44 = scmp.ne.s32.totalorder %s33, %s34
      %p45 = scmp.eq.s32.totalorder %s25, 0
      %p46 = por %p44, %p45
      %p47 = scmp.ne.s32.totalorder %s33, %s34
      %p48 = scmp.eq.s32.totalorder %s26, 1
      %p49 = por %p47, %p48
      %p51 = scmp.ne.s32.totalorder %s34, %s50
      %p52 = scmp.eq.s32.totalorder %s26, 0
      %p53 = por %p51, %p52
      %s55 = sadd.s32 %s54, 1
      %p58 = scmp.eq.s32.totalorder %s20, 1
      %p59 = scmp.ne.s32.totalorder %s54, %s56
      %p60 = scmp.eq.s32.totalorder %s20, 0
      %p61 = por %p59, %p60
      %p62 = scmp.ne.s32.totalorder %s54, %s56
      %p63 = scmp.eq.s32.totalorder %s25, 1
      %p64 = por %p62, %p63
      %p65 = scmp.ne.s32.totalorder %s56, %s57
      %p66 = scmp.eq.s32.totalorder %s25, 0
      %p67 = por %p65, %p66
      %p68 = scmp.ne.s32.totalorder %s56, %s57
      %p69 = scmp.eq.s32.totalorder %s26, 1
      %p70 = por %p68, %p69
      %p72 = scmp.ne.s32.totalorder %s57, %s71
      %p73 = scmp.eq.s32.totalorder %s26, 0
      %p74 = por %p72, %p73
      %s76 = sadd.s32 %s75, 1
      %p79 = scmp.eq.s32.totalorder %s20, 1
      %p80 = scmp.ne.s32.totalorder %s75, %s77
      %p81 = scmp.eq.s32.totalorder %s20, 0
      %p82 = por %p80, %p81
      %p83 = scmp.ne.s32.totalorder %s75, %s77
      %p84 = scmp.eq.s32.totalorder %s25, 1
      %p85 = por %p83, %p84
      %p86 = scmp.ne.s32.totalorder %s77, %s78
      %p87 = scmp.eq.s32.totalorder %s25, 0
      %p88 = por %p86, %p87
      %p89 = scmp.ne.s32.totalorder %s77, %s78
      %p90 = scmp.eq.s32.totalorder %s26, 1
      %p91 = por %p89, %p90
      %p93 = scmp.ne.s32.totalorder %s78, %s92
      %p94 = scmp.eq.s32.totalorder %s26, 0
      %p95 = por %p93, %p94
      %s96 = ssub.s32 %s20, %s27
      %p97 = scmp.eq.s32.totalorder %s96, 0
      %s99 = sadd.s32 %s98, 1
      %s100 = scalar_select %p97, %s98, %s99
      %p103 = pneg %p97
      %p104 = scmp.eq.s32.totalorder %s20, 1
      %p105 = por %p103, %p104
      %p106 = scmp.ne.s32.totalorder %s98, %s101
      %p107 = scmp.eq.s32.totalorder %s20, 0
      %p108 = por %p106, %p107
      %p109 = scmp.ne.s32.totalorder %s98, %s101
      %p110 = scmp.eq.s32.totalorder %s25, 1
      %p111 = por %p109, %p110
      %p112 = scmp.ne.s32.totalorder %s101, %s102
      %p113 = scmp.eq.s32.totalorder %s25, 0
      %p114 = por %p112, %p113
      %p115 = scmp.ne.s32.totalorder %s101, %s102
      %p116 = scmp.eq.s32.totalorder %s26, 1
      %p117 = por %p115, %p116
      %p119 = scmp.ne.s32.totalorder %s102, %s118
      %p120 = scmp.eq.s32.totalorder %s26, 0
      %p121 = por %p119, %p120
      %p122 = scmp.le.s32.totalorder 1, %s20
      %p123 = scmp.lt.s32.totalorder %s20, 3
      %p124 = pnand %p122, %p123
      %p125 = pneg %p124
      // Predicated region
      $region9: #{tpu_custom_call.1} parent=5 // pred_check
        _
      $region10: #{tpu_custom_call.1} parent=5 // pred_check_branch
        %127 = sbr.rel (%p124) target = $region12
      $region11: #{tpu_custom_call.1} parent=5 // pred_region
        %s128 = ssub.s32 %s20, 1
        // Predicated region
        $region13: #{tpu_custom_call.1} parent=11 // pred_check
          %p129 = pneg %p67
        $region14: #{tpu_custom_call.1} parent=11 // pred_check_branch
          %131 = sbr.rel (%p129) target = $region16
        $region15: #{tpu_custom_call.1} parent=11 // pred_region
          _
        $region16: #{tpu_custom_call.1} parent=11 // pred_fallthru
          _
        // Predicated region
        $region17: #{tpu_custom_call.1} parent=11 // pred_check
          %p132 = pneg %p88
        $region18: #{tpu_custom_call.1} parent=11 // pred_check_branch
          %134 = sbr.rel (%p132) target = $region20
        $region19: #{tpu_custom_call.1} parent=11 // pred_region
          _
        $region20: #{tpu_custom_call.1} parent=11 // pred_fallthru
          _
      $region12: #{tpu_custom_call.1} parent=5 // pred_fallthru
        _
      %p135 = scmp.lt.s32.totalorder %s20, 2
      // Predicated region
      $region21: #{tpu_custom_call.1} parent=5 // pred_check
        %p136 = pneg %p135
      $region22: #{tpu_custom_call.1} parent=5 // pred_check_branch
        %138 = sbr.rel (%p136) target = $region24
      $region23: #{tpu_custom_call.1} parent=5 // pred_region
        // Predicated region
        $region25: #{tpu_custom_call.1} parent=23 // pred_check
          %p139 = pneg %p40
        $region26: #{tpu_custom_call.1} parent=23 // pred_check_branch
          %141 = sbr.rel (%p139) target = $region28
        $region27: #{tpu_custom_call.1} parent=23 // pred_region
          %s142 = smul.u32 8, %s20
          %p143 = scmp.lt.s32.totalorder %s142, 15
          %s144 = scalar_select %p143, %s142, 15
          %s145 = smul.addr %s144, 8
          %s146 = scalar_lea.vmem %s1, %s145
          %s147 = smul.u32 8, %s20
        $region28: #{tpu_custom_call.1} parent=23 // pred_fallthru
          _
      $region24: #{tpu_custom_call.1} parent=5 // pred_fallthru
        _
      %p148 = scmp.le.s32.totalorder 1, %s20
      %p149 = scmp.lt.s32.totalorder %s20, 3
      %p150 = pnand %p148, %p149
      %p151 = pneg %p150
      // Predicated region
      $region29: #{tpu_custom_call.1} parent=5 // pred_check
        _
      $region30: #{tpu_custom_call.1} parent=5 // pred_check_branch
        %153 = sbr.rel (%p150) target = $region32
      $region31: #{tpu_custom_call.1} parent=5 // pred_region
        %s154 = ssub.s32 %s20, 1
        %s155 = smul.u32 8, %s25
        %p156 = scmp.lt.s32.totalorder %s155, 15
        %s157 = scalar_select %p156, %s155, 15
        %s158 = smul.addr %s157, 8
        %s159 = scalar_lea.vmem %s1, %s158
        %p160 = pneg %p46
        %p161 = pneg %p43
        %p162 = pneg %p67
        %p163 = pneg %p64
        %p164 = pneg %p88
        %p165 = pneg %p85
        %p166 = pneg %p114
        %p167 = pneg %p111
        %s168 = sand.u32 %s101, 1
        %s169 = scalar_lea.sflag [#allocation7], %s168
        %s170 = sand.u32 %s101, 1
        %s171 = smul.addr %s170, 64
        %s172 = scalar_lea.vmem [#allocation6], %s171
        %s173 = smul.u32 8, %s25
        %p174 = scmp.lt.s32.totalorder %s173, 15
        %s175 = scalar_select %p174, %s173, 15
        %s176 = smul.addr %s175, 8
        %s177 = scalar_lea.vmem %s1, %s176
        %s178 = smul.u32 8, %s25
        %s179 = smul.u32 8, %s25
        %s180 = smul.u32 %s25, 64
        loop: start=0, step=1, limit=64
        $region33: #{tpu_custom_call.1} parent=31 // loop_pre_header
          _
        $region34: #{tpu_custom_call.1} parent=31 // loop_header
          %s182 = sphi 0, %s186
          %p183 = scmp.ge.s32.totalorder %s182, 64
        $region35: #{tpu_custom_call.1} parent=31 // loop_header_branch
          %185 = sbr.rel (%p183) target = $region39
        $region36: #{tpu_custom_call.1} parent=31 // loop_body
          %s187 = sadd.s32 %s180, %s182
          %s188 = sld [smem:[#allocation5 + %s187]]
          %s189 = scalar_lea.vmem %s2, %s188
          %s190 = scalar_lea.vmem [#allocation2], %s182
          %p192 = scmp.lt.u32.totalorder 1, 8
          %p193 = pneg %p192
          // Predicated region
          $region40: #{tpu_custom_call.1} parent=36 // pred_check
            _
          $region41: #{tpu_custom_call.1} parent=36 // pred_check_branch
            %195 = sbr.rel (%p192) target = $region43
          $region42: #{tpu_custom_call.1} parent=36 // pred_region
            %s210 = sand.u32 1, 7
            %p211 = scmp.eq.s32.totalorder %s210, 0
            %p212 = pneg %p211
            // Predicated region
            $region55: #{tpu_custom_call.1} parent=42 // pred_check
              _
            $region56: #{tpu_custom_call.1} parent=42 // pred_check_branch
              %214 = sbr.rel (%p211) target = $region58
            $region57: #{tpu_custom_call.1} parent=42 // pred_region
              %s215 = sand.u32 1, 7
              %s216 = ssub.s32 1, %s215
              %s217 = scalar_lea.vmem %s189, %s216
              %s218 = ssub.s32 1, %s215
              %s219 = scalar_lea.vmem %s190, %s218 [#allocation2]
              %s220 = sshllo.u32 0, %s215
              loop: start=0, step=1, limit=1
              $region59: #{tpu_custom_call.1} parent=57 // loop_pre_header
                _
              $region60: #{tpu_custom_call.1} parent=57 // loop_header
                %s222 = sphi 0, %s226
                %p223 = scmp.ge.s32.totalorder %s222, 1
                %s227 = sphi %s217, %s217
                %s228 = sphi %s219, %s219
              $region61: #{tpu_custom_call.1} parent=57 // loop_header_branch
                %225 = sbr.rel (%p223) target = $region65
              $region62: #{tpu_custom_call.1} parent=57 // loop_body
                %v229 = vld [vmem:[%s227] sm:%s220]
                %230 = vst [vmem:[%s228] sm:%s220] %v229
              $region63: #{tpu_custom_call.1} parent=57 // loop_footer
                %s226 = sadd.s32 1, %s222
              $region64: #{tpu_custom_call.1} parent=57 // loop_footer_branch
                %221 = sbr.rel target = $region60
              $region65: #{tpu_custom_call.1} parent=57 // loop_exit
                _
            $region58: #{tpu_custom_call.1} parent=42 // pred_fallthru
              _
          $region43: #{tpu_custom_call.1} parent=36 // pred_fallthru
            _
          // Predicated region
          $region44: #{tpu_custom_call.1} parent=36 // pred_check
            %p196 = pneg %p192
          $region45: #{tpu_custom_call.1} parent=36 // pred_check_branch
            %198 = sbr.rel (%p196) target = $region47
          $region46: #{tpu_custom_call.1} parent=36 // pred_region
            %s199 = sshllo.u32 0, 1
            loop: start=0, step=1, limit=1
            $region48: #{tpu_custom_call.1} parent=46 // loop_pre_header
              _
            $region49: #{tpu_custom_call.1} parent=46 // loop_header
              %s201 = sphi 0, %s205
              %p202 = scmp.ge.s32.totalorder %s201, 1
              %s206 = sphi %s189, %s189
              %s207 = sphi %s190, %s190
            $region50: #{tpu_custom_call.1} parent=46 // loop_header_branch
              %204 = sbr.rel (%p202) target = $region54
            $region51: #{tpu_custom_call.1} parent=46 // loop_body
              %v208 = vld [vmem:[%s206] sm:%s199]
              %209 = vst [vmem:[%s207] sm:%s199] %v208
            $region52: #{tpu_custom_call.1} parent=46 // loop_footer
              %s205 = sadd.s32 1, %s201
            $region53: #{tpu_custom_call.1} parent=46 // loop_footer_branch
              %200 = sbr.rel target = $region49
            $region54: #{tpu_custom_call.1} parent=46 // loop_exit
              _
          $region47: #{tpu_custom_call.1} parent=36 // pred_fallthru
            _
          // Predicated region
          $region66: #{tpu_custom_call.1} parent=36 // pred_check
            _
          $region67: #{tpu_custom_call.1} parent=36 // pred_check_branch
            %233 = sbr.rel (0) target = $region69
          $region68: #{tpu_custom_call.1} parent=36 // pred_region
            %234 = vsyncadd [#allocation3], 16
          $region69: #{tpu_custom_call.1} parent=36 // pred_fallthru
            _
        $region37: #{tpu_custom_call.1} parent=31 // loop_footer
          %s186 = sadd.s32 1, %s182
        $region38: #{tpu_custom_call.1} parent=31 // loop_footer_branch
          %181 = sbr.rel target = $region34
        $region39: #{tpu_custom_call.1} parent=31 // loop_exit
          _
        %p235 = scmp.lt.s32.totalorder %s180, 0
        %s236 = ssub.s32 0, %s180
        %s237 = scalar_select %p235, %s236, %s180
        %s238 = sand.u32 %s237, 63
        %s239 = ssub.s32 0, %s238
        %s240 = scalar_select %p235, %s239, %s238
        %p241 = scmp.ne.s32.totalorder %s240, 0
        %p242 = scmp.lt.s32.totalorder %s240, 0
        %p243 = pnand %p242, %p241
        %p244 = pneg %p243
        %s245 = sadd.s32 %s240, 64
        %s246 = scalar_select %p244, %s245, %s240
        %s247 = scalar_lea.vmem %s4, %s246
        %v248 = vld [vmem:[%s247] sm:$0xff]
        %v249 = vld [vmem:[%s247 + $0x8] sm:$0xff]
        %v250 = vld [vmem:[%s247 + $0x10] sm:$0xff]
        %v251 = vld [vmem:[%s247 + $0x18] sm:$0xff]
        %v252 = vld [vmem:[%s247 + $0x20] sm:$0xff]
        %v253 = vld [vmem:[%s247 + $0x28] sm:$0xff]
        %v254 = vld [vmem:[%s247 + $0x30] sm:$0xff]
        %v255 = vld [vmem:[%s247 + $0x38] sm:$0xff]
        %v256 = vld [vmem:[%s177] sm:$0xff]
        %v257 = vld [vmem:[%s177 + $0x8] sm:$0xff]
        %v258 = vld [vmem:[%s177 + $0x10] sm:$0xff]
        %v259 = vld [vmem:[%s177 + $0x18] sm:$0xff]
        %v260 = vld [vmem:[%s177 + $0x20] sm:$0xff]
        %v261 = vld [vmem:[%s177 + $0x28] sm:$0xff]
        %v262 = vld [vmem:[%s177 + $0x30] sm:$0xff]
        %v263 = vld [vmem:[%s177 + $0x38] sm:$0xff]
        %v264 = vld [vmem:[%s3] sm:$0x7]
        %vm265 = vcmp.eq.s32.totalorder %v256, 0
        %vm266 = vcmp.eq.s32.totalorder %v257, 0
        %vm267 = vcmp.eq.s32.totalorder %v258, 0
        %vm268 = vcmp.eq.s32.totalorder %v259, 0
        %vm269 = vcmp.eq.s32.totalorder %v260, 0
        %vm270 = vcmp.eq.s32.totalorder %v261, 0
        %vm271 = vcmp.eq.s32.totalorder %v262, 0
        %vm272 = vcmp.eq.s32.totalorder %v263, 0
        %vm273 = vcmp.eq.s32.totalorder %v256, 1
        %vm274 = vcmp.eq.s32.totalorder %v257, 1
        %vm275 = vcmp.eq.s32.totalorder %v258, 1
        %vm276 = vcmp.eq.s32.totalorder %v259, 1
        %vm277 = vcmp.eq.s32.totalorder %v260, 1
        %vm278 = vcmp.eq.s32.totalorder %v261, 1
        %vm279 = vcmp.eq.s32.totalorder %v262, 1
        %vm280 = vcmp.eq.s32.totalorder %v263, 1
        %v281 = vsel %vm273, 1, 0
        %v282 = vsel %vm274, 1, 0
        %v283 = vsel %vm275, 1, 0
        %v284 = vsel %vm276, 1, 0
        %v285 = vsel %vm277, 1, 0
        %v286 = vsel %vm278, 1, 0
        %v287 = vsel %vm279, 1, 0
        %v288 = vsel %vm280, 1, 0
        %289 = vset.pattern.permute.xlu0 0
        %290 = vperm.xlu0 %289, %v281
        %v291 = vpop.permute.xlu0 %290
        %292 = vset.pattern.permute.xlu0 0
        %293 = vperm.xlu0 %292, %v282
        %v294 = vpop.permute.xlu0 %293
        %295 = vset.pattern.permute.xlu0 0
        %296 = vperm.xlu0 %295, %v283
        %v297 = vpop.permute.xlu0 %296
        %298 = vset.pattern.permute.xlu0 0
        %299 = vperm.xlu0 %298, %v284
        %v300 = vpop.permute.xlu0 %299
        %301 = vset.pattern.permute.xlu0 0
        %302 = vperm.xlu0 %301, %v285
        %v303 = vpop.permute.xlu0 %302
        %304 = vset.pattern.permute.xlu0 0
        %305 = vperm.xlu0 %304, %v286
        %v306 = vpop.permute.xlu0 %305
        %307 = vset.pattern.permute.xlu0 0
        %308 = vperm.xlu0 %307, %v287
        %v309 = vpop.permute.xlu0 %308
        %310 = vset.pattern.permute.xlu0 0
        %311 = vperm.xlu0 %310, %v288
        %v312 = vpop.permute.xlu0 %311
        %vm313 = vcmp.eq.s32.totalorder %v291, 1
        %vm314 = vcmp.eq.s32.totalorder %v294, 1
        %vm315 = vcmp.eq.s32.totalorder %v297, 1
        %vm316 = vcmp.eq.s32.totalorder %v300, 1
        %vm317 = vcmp.eq.s32.totalorder %v303, 1
        %vm318 = vcmp.eq.s32.totalorder %v306, 1
        %vm319 = vcmp.eq.s32.totalorder %v309, 1
        %vm320 = vcmp.eq.s32.totalorder %v312, 1
        %v321 = vlaneseq
        %v322 = vshrl.u32 %v321, 7
        %v323 = vsub.s32 1, %v322
        %v324 = vrot.slane %v264, %v323
        %v325 = vlaneseq
        %v326 = vshrl.u32 %v325, 7
        %v327 = vsub.s32 2, %v326
        %v328 = vrot.slane %v264, %v327
        %v329 = vsel %vm313, %v324, %v328
        %v330 = vsel %vm314, %v324, %v328
        %v331 = vsel %vm315, %v324, %v328
        %v332 = vsel %vm316, %v324, %v328
        %v333 = vsel %vm317, %v324, %v328
        %v334 = vsel %vm318, %v324, %v328
        %v335 = vsel %vm319, %v324, %v328
        %v336 = vsel %vm320, %v324, %v328
        %v337 = vsel %vm265, 1, 0
        %v338 = vsel %vm266, 1, 0
        %v339 = vsel %vm267, 1, 0
        %v340 = vsel %vm268, 1, 0
        %v341 = vsel %vm269, 1, 0
        %v342 = vsel %vm270, 1, 0
        %v343 = vsel %vm271, 1, 0
        %v344 = vsel %vm272, 1, 0
        %345 = vset.pattern.permute.xlu0 0
        %346 = vperm.xlu0 %345, %v337
        %v347 = vpop.permute.xlu0 %346
        %348 = vset.pattern.permute.xlu0 0
        %349 = vperm.xlu0 %348, %v338
        %v350 = vpop.permute.xlu0 %349
        %351 = vset.pattern.permute.xlu0 0
        %352 = vperm.xlu0 %351, %v339
        %v353 = vpop.permute.xlu0 %352
        %354 = vset.pattern.permute.xlu0 0
        %355 = vperm.xlu0 %354, %v340
        %v356 = vpop.permute.xlu0 %355
        %357 = vset.pattern.permute.xlu0 0
        %358 = vperm.xlu0 %357, %v341
        %v359 = vpop.permute.xlu0 %358
        %360 = vset.pattern.permute.xlu0 0
        %361 = vperm.xlu0 %360, %v342
        %v362 = vpop.permute.xlu0 %361
        %363 = vset.pattern.permute.xlu0 0
        %364 = vperm.xlu0 %363, %v343
        %v365 = vpop.permute.xlu0 %364
        %366 = vset.pattern.permute.xlu0 0
        %367 = vperm.xlu0 %366, %v344
        %v368 = vpop.permute.xlu0 %367
        %vm369 = vcmp.eq.s32.totalorder %v347, 1
        %vm370 = vcmp.eq.s32.totalorder %v350, 1
        %vm371 = vcmp.eq.s32.totalorder %v353, 1
        %vm372 = vcmp.eq.s32.totalorder %v356, 1
        %vm373 = vcmp.eq.s32.totalorder %v359, 1
        %vm374 = vcmp.eq.s32.totalorder %v362, 1
        %vm375 = vcmp.eq.s32.totalorder %v365, 1
        %vm376 = vcmp.eq.s32.totalorder %v368, 1
        %v377 = vlaneseq
        %v378 = vshrl.u32 %v377, 7
        %v379 = vsub.s32 0, %v378
        %v380 = vrot.slane %v264, %v379
        %v381 = vsel %vm369, %v380, %v329
        %v382 = vsel %vm370, %v380, %v330
        %v383 = vsel %vm371, %v380, %v331
        %v384 = vsel %vm372, %v380, %v332
        %v385 = vsel %vm373, %v380, %v333
        %v386 = vsel %vm374, %v380, %v334
        %v387 = vsel %vm375, %v380, %v335
        %v388 = vsel %vm376, %v380, %v336
        loop: start=0, step=1, limit=64
        $region70: #{tpu_custom_call.1} parent=31 // loop_pre_header
          _
        $region71: #{tpu_custom_call.1} parent=31 // loop_header
          %s390 = sphi 0, %s394
          %p391 = scmp.ge.s32.totalorder %s390, 64
        $region72: #{tpu_custom_call.1} parent=31 // loop_header_branch
          %393 = sbr.rel (%p391) target = $region76
        $region73: #{tpu_custom_call.1} parent=31 // loop_body
          %s395 = sadd.s32 %s180, %s390
          %s396 = sld [smem:[#allocation5 + %s395]]
          %s397 = smul.u32 1, 1
          %s398 = sshll.u32 %s397, 4
          %399 = dma.done [#allocation3], %s398
        $region74: #{tpu_custom_call.1} parent=31 // loop_footer
          %s394 = sadd.s32 1, %s390
        $region75: #{tpu_custom_call.1} parent=31 // loop_footer_branch
          %389 = sbr.rel target = $region71
        $region76: #{tpu_custom_call.1} parent=31 // loop_exit
          _
        %v400 = vld [vmem:[#allocation2] sm:$0xff]
        %v401 = vld [vmem:[#allocation2 + $0x8] sm:$0xff]
        %v402 = vld [vmem:[#allocation2 + $0x10] sm:$0xff]
        %v403 = vld [vmem:[#allocation2 + $0x18] sm:$0xff]
        %v404 = vld [vmem:[#allocation2 + $0x20] sm:$0xff]
        %v405 = vld [vmem:[#allocation2 + $0x28] sm:$0xff]
        %v406 = vld [vmem:[#allocation2 + $0x30] sm:$0xff]
        %v407 = vld [vmem:[#allocation2 + $0x38] sm:$0xff]
        %v408 = vadd.f32 %v400, %v248
        %v409 = vadd.f32 %v401, %v249
        %v410 = vadd.f32 %v402, %v250
        %v411 = vadd.f32 %v403, %v251
        %v412 = vadd.f32 %v404, %v252
        %v413 = vadd.f32 %v405, %v253
        %v414 = vadd.f32 %v406, %v254
        %v415 = vadd.f32 %v407, %v255
        %v416 = vadd.f32 %v408, %v381
        %v417 = vadd.f32 %v409, %v382
        %v418 = vadd.f32 %v410, %v383
        %v419 = vadd.f32 %v411, %v384
        %v420 = vadd.f32 %v412, %v385
        %v421 = vadd.f32 %v413, %v386
        %v422 = vadd.f32 %v414, %v387
        %v423 = vadd.f32 %v415, %v388
        %424 = vst [vmem:[%s172] sm:$0xff] %v416
        %425 = vst [vmem:[%s172 + $0x8] sm:$0xff] %v417
        %426 = vst [vmem:[%s172 + $0x10] sm:$0xff] %v418
        %427 = vst [vmem:[%s172 + $0x18] sm:$0xff] %v419
        %428 = vst [vmem:[%s172 + $0x20] sm:$0xff] %v420
        %429 = vst [vmem:[%s172 + $0x28] sm:$0xff] %v421
        %430 = vst [vmem:[%s172 + $0x30] sm:$0xff] %v422
        %431 = vst [vmem:[%s172 + $0x38] sm:$0xff] %v423
        %s432 = sand.u32 %s101, 1
        %s433 = scalar_lea.sflag [#allocation7], %s432
        %s434 = sand.u32 %s101, 1
        %s435 = smul.addr %s434, 64
        %s436 = scalar_lea.vmem [#allocation6], %s435
        // Predicated region
        $region77: #{tpu_custom_call.1} parent=31 // pred_check
          %p437 = pneg %p111
        $region78: #{tpu_custom_call.1} parent=31 // pred_check_branch
          %439 = sbr.rel (%p437) target = $region80
        $region79: #{tpu_custom_call.1} parent=31 // pred_region
          %s440 = smul.u32 8, %s25
          %s442 = ssub.s32 1024, 1024
          %443 = vsyncadd %s433, %s442
          %s444 = smul.addr %s440, 128
          %s445 = scalar_lea.hbm %s5, %s444
          %s446 = sshll.u32 %s436, 4
          %s447 = int_to_ptr.vmem [resolvable:$true] %s446
          %452 = dma.vmem_to_hbm [thread:$0]  %s447, 1024, %s445, %s433, 128, 128, 8
        $region80: #{tpu_custom_call.1} parent=31 // pred_fallthru
          _
      $region32: #{tpu_custom_call.1} parent=5 // pred_fallthru
        _
      %p453 = scmp.le.s32.totalorder 2, %s20
      // Predicated region
      $region81: #{tpu_custom_call.1} parent=5 // pred_check
        %p454 = pneg %p453
      $region82: #{tpu_custom_call.1} parent=5 // pred_check_branch
        %456 = sbr.rel (%p454) target = $region84
      $region83: #{tpu_custom_call.1} parent=5 // pred_region
        %s457 = ssub.s32 %s20, 2
        // Predicated region
        $region85: #{tpu_custom_call.1} parent=83 // pred_check
          %p458 = pneg %p117
        $region86: #{tpu_custom_call.1} parent=83 // pred_check_branch
          %460 = sbr.rel (%p458) target = $region88
        $region87: #{tpu_custom_call.1} parent=83 // pred_region
          %s461 = sand.u32 %s102, 1
          %s462 = scalar_lea.sflag [#allocation7], %s461
          %s463 = sand.u32 %s102, 1
          %s464 = smul.addr %s463, 64
          %s465 = scalar_lea.vmem [#allocation6], %s464
          %466 = dma.done %s462, 1024
        $region88: #{tpu_custom_call.1} parent=83 // pred_fallthru
          _
      $region84: #{tpu_custom_call.1} parent=5 // pred_fallthru
        _
    $region6: #{tpu_custom_call.1} parent=1 // loop_footer
      %s24 = sadd.s32 1, %s20
    $region7: #{tpu_custom_call.1} parent=1 // loop_footer_branch
      %19 = sbr.rel target = $region3
    $region8: #{tpu_custom_call.1} parent=1 // loop_exit
      _
    %467 = vsyncpa [#allocation7], 1
    %s468 = scalar_lea.sflag [#allocation7], 1
    %469 = vsyncpa %s468, 1
  %470 = vsyncmov [#allocation3]
  %s471 = vpop.sfrf %470
  %p472 = scmp.eq.s32.totalorder %s471, 0
  %p473 = pneg %p472
  %475 = shalt.err (%p473)

</llo_original>
